<compile_context>
chip_gen: v6e
topology: v6e:2x2x1
jax: 0.10.0
libtpu: 0.0.40
codegen_flags: <defaults>
</compile_context>

<pallas_src>
import functools

import jax
import jax.numpy as jnp
from jax.experimental import pallas as pl
from jax.experimental.pallas import tpu as pltpu


def _round_up(x, m):
    return ((x + m - 1) // m) * m


def _conv_matmul_kernel(x_ref, w_ref, b_ref, o_ref):
    # x_ref: (1, TM, K_pad)  streaming patch tile (per-sample M rows)
    # w_ref: (OC8, K_pad)    resident weights (same block every grid step)
    # b_ref: (OC8, 1)        resident bias
    # o_ref: (1, OC8, TM)    output: lane dim = TM (128-multiple, unmasked vst)
    # NT matmul on the MXU: out[oc, m] = sum_k w[oc, k] * x[m, k]
    acc = jax.lax.dot_general(
        w_ref[...], x_ref[0],
        dimension_numbers=(((1,), (1,)), ((), ())),
        preferred_element_type=jnp.float32)            # (OC8, TM)
    o_ref[0] = acc + b_ref[...]


def _im2col_cl(x_pad_cl, kd, kh, kw, sd, sh, sw, Do, Ho, Wo):
    """Channels-last im2col: (N, Dp, Hp, Wp, C) -> (N, Do*Ho*Wo, kd*kh*kw*C).

    K order is tap-major (dz, dy, dx, c): strided slices + one concatenate,
    no transpose of the expanded tensor (wrapper glue, fused under the jit).
    """
    N, _, _, _, C = x_pad_cl.shape
    cols = []
    for dz in range(kd):
        for dy in range(kh):
            for dx in range(kw):
                cols.append(x_pad_cl[:, dz:dz + sd * Do:sd,
                                        dy:dy + sh * Ho:sh,
                                        dx:dx + sw * Wo:sw, :])
    x_col = jnp.concatenate(cols, axis=-1)             # (N, Do, Ho, Wo, T*C)
    return x_col.reshape(N, Do * Ho * Wo, kd * kh * kw * C)


def _choose_tm(K_pad, OC8, M_per, N, budget_bytes=32 * 1024 * 1024):
    """M tile (lane dim of the output, multiple of 128) that fits VMEM.

    VMEM estimate: 2x (TM, K_pad) input buffers + 2x (OC8, TM) output buffers
    + 2x resident weights/bias (Pallas allocates buffer_count even for
    constant-index blocks).  Cap at 2048 rows; also guarantee >= 2 total grid
    steps when possible so v7x's two TensorCores both get work.
    """
    per_row = 4 * 2 * (K_pad + OC8)                 # streaming in + out, x2 bufs
    fixed = 4 * 2 * (OC8 * K_pad + OC8)             # weights + bias, x2 bufs
    tm = (budget_bytes - fixed) // max(per_row, 1)
    tm = max(128, min(2048, (tm // 128) * 128))
    tm = min(tm, _round_up(M_per, 128))
    n_steps = N * (-(-M_per // tm))
    if n_steps < 2 and M_per > 128:
        tm = max(128, _round_up(-(-M_per // 2), 128))
    return tm


@functools.partial(jax.jit, static_argnames=("stride", "padding"))
def myconv3d_forward(x, weight, bias, stride, padding):
    """Exact forward semantics of MyConv3d.forward (NCDHW in, NCDHW out, f32)."""
    OC, IC, kd, kh, kw = weight.shape
    sd, sh, sw = stride
    # Module convention: padding = (forward, backward, up, down, left, right),
    # i.e. pair 0 -> D, pair 1 -> H, pair 2 -> W (MyConv3d forwards them to
    # F.pad in reversed-dim order itself).
    pf, pb, pu, pdn, pleft, pright = padding

    x = x.astype(jnp.float32)
    x_pad = jnp.pad(x, ((0, 0), (0, 0), (pf, pb), (pu, pdn), (pleft, pright)))

    N, C, Dp, Hp, Wp = x_pad.shape
    Do = (Dp - kd) // sd + 1
    Ho = (Hp - kh) // sh + 1
    Wo = (Wp - kw) // sw + 1

    # Channels-last once (small copy of the *input*-sized tensor), then
    # tap-major im2col with no transpose of the expanded tensor.
    x_pad_cl = jnp.transpose(x_pad, (0, 2, 3, 4, 1))           # (N,Dp,Hp,Wp,C)
    x_col = _im2col_cl(x_pad_cl, kd, kh, kw, sd, sh, sw, Do, Ho, Wo)
    M_per = Do * Ho * Wo
    K = C * kd * kh * kw

    K_pad = _round_up(K, 128)            # lane dim of the patch tiles
    OC8 = _round_up(OC, 8)               # sublane dim of the output (not 128!)
    TM = _choose_tm(K_pad, OC8, M_per, N)
    M_pad_per = _round_up(M_per, TM)
    m_tiles = M_pad_per // TM

    x_col = jnp.pad(x_col, ((0, 0), (0, M_pad_per - M_per), (0, K_pad - K)))

    # Weight in matching K order (dz, dy, dx, c): (OC, IC, kd, kh, kw)
    # -> (OC, kd, kh, kw, IC) -> (OC, K); zero-pad to (OC8, K_pad).
    w_mat = jnp.transpose(weight.astype(jnp.float32), (0, 2, 3, 4, 1))
    w_mat = jnp.pad(w_mat.reshape(OC, K), ((0, OC8 - OC), (0, K_pad - K)))
    b2d = jnp.pad(bias.astype(jnp.float32).reshape(OC, 1),
                  ((0, OC8 - OC), (0, 0)))                       # (OC8, 1)

    cost = pl.CostEstimate(
        flops=2 * N * M_pad_per * K_pad * OC8,
        transcendentals=0,
        bytes_accessed=4 * (N * M_pad_per * K_pad + OC8 * K_pad
                            + N * OC8 * M_pad_per),
    )

    out = pl.pallas_call(
        _conv_matmul_kernel,
        out_shape=jax.ShapeDtypeStruct((N, OC8, M_pad_per), jnp.float32),
        grid=(N, m_tiles),
        in_specs=[
            pl.BlockSpec((1, TM, K_pad), lambda n, m: (n, m, 0)),   # patches
            pl.BlockSpec((OC8, K_pad), lambda n, m: (0, 0)),        # weights
            pl.BlockSpec((OC8, 1), lambda n, m: (0, 0)),            # bias
        ],
        out_specs=pl.BlockSpec((1, OC8, TM), lambda n, m: (n, 0, m)),
        compiler_params=pltpu.CompilerParams(
            # Independent (sample, M-tile) work items -> megacore sharding.
            dimension_semantics=("parallel", "parallel"),
            vmem_limit_bytes=40 * 1024 * 1024,
        ),
        cost_estimate=cost,
    )(x_col, w_mat, b2d)

    # Output is already (N, OC, M) ordered: contiguous slice + reshape to
    # NCDHW, no post-kernel transpose.
    out = out[:, :OC, :M_per].reshape(N, OC, Do, Ho, Wo)
    return out


class Net:
    """JAX/Pallas equivalent of the PyTorch Net module (forward only)."""

    def __init__(self, in_channel, out_channel, kernel, weight, bias, stride, padding):
        del in_channel, out_channel, kernel  # shapes carried by weight/bias
        self.weight = weight
        self.bias = bias
        self.stride = tuple(int(s) for s in stride)
        self.padding = tuple(int(p) for p in padding)

    def __call__(self, x):
        return myconv3d_forward(x, self.weight, self.bias, self.stride, self.padding)


if __name__ == "__main__":
    key = jax.random.PRNGKey(0)
    k_x, k_w, k_b = jax.random.split(key, 3)

    # Small shapes consistent with the module.
    N, IC, D, H, W = 2, 4, 8, 10, 12
    OC = 8
    kernel = (3, 3, 3)
    stride = (2, 2, 2)
    padding = (1, 1, 1, 1, 1, 1)  # (front, back, up, down, left, right)

    x = jax.random.normal(k_x, (N, IC, D, H, W), dtype=jnp.float32)
    weight = jax.random.normal(k_w, (OC, IC) + kernel, dtype=jnp.float32) * 0.1
    bias = jax.random.normal(k_b, (OC,), dtype=jnp.float32) * 0.1

    net = Net(IC, OC, kernel, weight, bias, stride, padding)
    out = net(x)
    out = jax.block_until_ready(out)

    # Reference check against XLA's conv (same semantics as the torch module).
    ref = jax.lax.conv_general_dilated(
        jnp.pad(x, ((0, 0), (0, 0), (1, 1), (1, 1), (1, 1))),
        weight,
        window_strides=stride,
        padding="VALID",
        dimension_numbers=("NCDHW", "OIDHW", "NCDHW"),
    ) + bias[None, :, None, None, None]
    assert out.shape == ref.shape, (out.shape, ref.shape)
    assert jnp.allclose(out, ref, atol=5e-4, rtol=5e-4), "mismatch vs XLA conv reference"

    print("KERNEL_OK")
</pallas_src>

<mosaic_0001>
module attributes {stable_mosaic.version = 11 : i64} {
  func.func @_conv_matmul_kernel(%arg0: i32, %arg1: i32, %arg2: memref<1x128x128xf32, #tpu.memory_space<vmem>>, %arg3: memref<8x128xf32, #tpu.memory_space<vmem>>, %arg4: memref<8x1xf32, #tpu.memory_space<vmem>>, %arg5: memref<1x8x128xf32, #tpu.memory_space<vmem>>) attributes {dimension_semantics = [#tpu.dimension_semantics<parallel>, #tpu.dimension_semantics<parallel>], iteration_bounds = array<i64: 2, 1>, scalar_prefetch = 0 : i64, scratch_operands = 0 : i64, tpu.core_type = #tpu.core_type<tc>, window_params = [{transform_indices = @transform_0, window_bounds = array<i64: 1, 128, 128>}, {pipeline_mode = #tpu.pipeline_mode<synchronous>, transform_indices = @transform_1, window_bounds = array<i64: 8, 128>}, {pipeline_mode = #tpu.pipeline_mode<synchronous>, transform_indices = @transform_2, window_bounds = array<i64: 8, 1>}, {transform_indices = @transform_3, window_bounds = array<i64: 1, 8, 128>}]} {
    %c0 = arith.constant 0 : index
    %c0_0 = arith.constant 0 : index
    %0 = vector.load %arg3[%c0, %c0_0] : memref<8x128xf32, #tpu.memory_space<vmem>>, vector<8x128xf32>
    %c0_1 = arith.constant 0 : index
    %c0_2 = arith.constant 0 : index
    %c0_3 = arith.constant 0 : index
    %1 = vector.load %arg2[%c0_1, %c0_2, %c0_3] : memref<1x128x128xf32, #tpu.memory_space<vmem>>, vector<1x128x128xf32>
    %2 = vector.shape_cast %1 : vector<1x128x128xf32> to vector<128x128xf32>
    %cst = arith.constant dense<0.000000e+00> : vector<8x128xf32>
    %3 = tpu.matmul %0, %2, %cst {dimension_numbers = #tpu.dot_dimension_numbers<[1], [1], [0], [0], [0, 0, 1, 0], [], []>} : vector<8x128xf32>, vector<128x128xf32>, vector<8x128xf32> -> vector<8x128xf32>
    %c0_4 = arith.constant 0 : index
    %c0_5 = arith.constant 0 : index
    %4 = vector.load %arg4[%c0_4, %c0_5] : memref<8x1xf32, #tpu.memory_space<vmem>>, vector<8x1xf32>
    %5 = vector.broadcast %4 : vector<8x1xf32> to vector<8x128xf32>
    %6 = arith.addf %3, %5 : vector<8x128xf32>
    %c0_6 = arith.constant 0 : index
    %c0_7 = arith.constant 0 : index
    %c0_8 = arith.constant 0 : index
    %7 = vector.load %arg5[%c0_6, %c0_7, %c0_8] : memref<1x8x128xf32, #tpu.memory_space<vmem>>, vector<1x8x128xf32>
    %8 = vector.shape_cast %7 : vector<1x8x128xf32> to vector<8x128xf32>
    %9 = vector.shape_cast %6 : vector<8x128xf32> to vector<1x8x128xf32>
    tpu.vector_store %arg5[%c0_6, %c0_7, %c0_8], %9 {strides = array<i32>} : memref<1x8x128xf32, #tpu.memory_space<vmem>>, vector<1x8x128xf32>,
    return
  }
  func.func @transform_0(%arg0: i32, %arg1: i32) -> (i32, i32, i32) {
    %c0_i32 = arith.constant 0 : i32
    %c0_i32_0 = arith.constant 0 : i32
    return %arg0, %arg1, %c0_i32 : i32, i32, i32
  }
  func.func @transform_1(%arg0: i32, %arg1: i32) -> (i32, i32) {
    %c0_i32 = arith.constant 0 : i32
    %c0_i32_0 = arith.constant 0 : i32
    %c0_i32_1 = arith.constant 0 : i32
    return %c0_i32, %c0_i32_0 : i32, i32
  }
  func.func @transform_2(%arg0: i32, %arg1: i32) -> (i32, i32) {
    %c0_i32 = arith.constant 0 : i32
    %c0_i32_0 = arith.constant 0 : i32
    %c0_i32_1 = arith.constant 0 : i32
    return %c0_i32, %c0_i32_0 : i32, i32
  }
  func.func @transform_3(%arg0: i32, %arg1: i32) -> (i32, i32, i32) {
    %c0_i32 = arith.constant 0 : i32
    %c0_i32_0 = arith.constant 0 : i32
    return %arg0, %c0_i32, %arg1 : i32, i32, i32
  }
}

</mosaic_0001>

<llo_original>
// kernel: myconv3d_forward.1
$region0: #{myconv3d_forward.1}
  #allocation0 [shape = 'u32[]', space=smem, size = 0x4, offset = 0x4, fixed_abs, tag = 'smem constant byte address 0x4 - core index']
  #allocation1 [shape = 'u32[144,128]{1,0:T(1,128)}', space=vmem, size = 0x12000, scoped, tag = 'internal scratch']
  %s0 = inlined_call_operand.vmem [shape: f32[2,128,128], index: 0, kind: input, shape index: {}]
  %s1 = inlined_call_operand.vmem [shape: f32[8,128], index: 1, kind: input, shape index: {}]
  %s2 = inlined_call_operand.vmem [shape: f32[8,1], index: 2, kind: input, shape index: {}]
  %s3 = inlined_call_operand.vmem [shape: f32[2,8,128], index: 3, kind: output, shape index: {}]
  %s4 = sld [smem:[#allocation0]]
  $region45: #{myconv3d_forward.1} parent=0
    _
  %s6 = ssub.s32 1, %s4
  %s7 = scalar_select 0, %s6, %s4
  loop: start=0, step=1, limit=4
  $region2: #{myconv3d_forward.1} parent=0 // loop_pre_header
    _
  $region3: #{myconv3d_forward.1} parent=0 // loop_header
    %s9 = sphi 0, %s13
    %p10 = scmp.ge.s32.totalorder %s9, 4
    %s16 = sphi 0, %s28
    %s17 = sphi 0, %s24
    %s18 = sphi 0, %s16
    %s19 = sphi 0, %s17
    %s20 = sphi 0, %s18
    %s21 = sphi 0, %s19
    %s33 = sphi 0, %s35
    %s36 = sphi 0, %s33
    %s37 = sphi 0, %s36
    %s53 = sphi 0, %s37
    %s57 = sphi 0, %s57
    %s59 = sphi 0, %s57
    %s60 = sphi 0, %s59
    %s74 = sphi 0, %s60
    %s78 = sphi 0, %s78
    %s80 = sphi 0, %s78
    %s81 = sphi 0, %s80
    %s95 = sphi 0, %s81
    %s103 = sphi 0, %s105
    %s106 = sphi 0, %s103
    %s107 = sphi 0, %s106
    %s123 = sphi 0, %s107
  $region4: #{myconv3d_forward.1} parent=0 // loop_header_branch
    %12 = sbr.rel (%p10) target = $region8
  $region5: #{myconv3d_forward.1} parent=0 // loop_body
    %s14 = ssub.s32 %s9, 1
    %s15 = ssub.s32 %s9, 2
    %s22 = sadd.s32 1, %s17
    %p23 = scmp.ge.s32.totalorder %s22, 1
    %s24 = scalar_select %p23, 0, %s22
    %s25 = sadd.s32 1, %s16
    %s26 = scalar_select %p23, %s25, %s16
    %p27 = scmp.ge.s32.totalorder %s26, 2
    %s28 = scalar_select %p27, 0, %s26
    %s29 = ssub.s32 %s16, %s28
    %s30 = ssub.s32 %s17, %s24
    %s31 = sor.u32 %s29, %s30
    %p32 = scmp.eq.s32.totalorder %s31, 0
    %s34 = sadd.s32 %s33, 1
    %s35 = scalar_select %p32, %s33, %s34
    %p38 = pneg %p32
    %p39 = scmp.eq.s32.totalorder %s9, 1
    %p40 = por %p38, %p39
    %p41 = scmp.ne.s32.totalorder %s33, %s36
    %p42 = scmp.eq.s32.totalorder %s9, 0
    %p43 = por %p41, %p42
    %p44 = scmp.ne.s32.totalorder %s33, %s36
    %p45 = scmp.eq.s32.totalorder %s14, 1
    %p46 = por %p44, %p45
    %p47 = scmp.ne.s32.totalorder %s36, %s37
    %p48 = scmp.eq.s32.totalorder %s14, 0
    %p49 = por %p47, %p48
    %p50 = scmp.ne.s32.totalorder %s36, %s37
    %p51 = scmp.eq.s32.totalorder %s15, 1
    %p52 = por %p50, %p51
    %p54 = scmp.ne.s32.totalorder %s37, %s53
    %p55 = scmp.eq.s32.totalorder %s15, 0
    %p56 = por %p54, %p55
    %s58 = sadd.s32 %s57, 1
    %p61 = scmp.eq.s32.totalorder %s9, 1
    %p62 = scmp.ne.s32.totalorder %s57, %s59
    %p63 = scmp.eq.s32.totalorder %s9, 0
    %p64 = por %p62, %p63
    %p65 = scmp.ne.s32.totalorder %s57, %s59
    %p66 = scmp.eq.s32.totalorder %s14, 1
    %p67 = por %p65, %p66
    %p68 = scmp.ne.s32.totalorder %s59, %s60
    %p69 = scmp.eq.s32.totalorder %s14, 0
    %p70 = por %p68, %p69
    %p71 = scmp.ne.s32.totalorder %s59, %s60
    %p72 = scmp.eq.s32.totalorder %s15, 1
    %p73 = por %p71, %p72
    %p75 = scmp.ne.s32.totalorder %s60, %s74
    %p76 = scmp.eq.s32.totalorder %s15, 0
    %p77 = por %p75, %p76
    %s79 = sadd.s32 %s78, 1
    %p82 = scmp.eq.s32.totalorder %s9, 1
    %p83 = scmp.ne.s32.totalorder %s78, %s80
    %p84 = scmp.eq.s32.totalorder %s9, 0
    %p85 = por %p83, %p84
    %p86 = scmp.ne.s32.totalorder %s78, %s80
    %p87 = scmp.eq.s32.totalorder %s14, 1
    %p88 = por %p86, %p87
    %p89 = scmp.ne.s32.totalorder %s80, %s81
    %p90 = scmp.eq.s32.totalorder %s14, 0
    %p91 = por %p89, %p90
    %p92 = scmp.ne.s32.totalorder %s80, %s81
    %p93 = scmp.eq.s32.totalorder %s15, 1
    %p94 = por %p92, %p93
    %p96 = scmp.ne.s32.totalorder %s81, %s95
    %p97 = scmp.eq.s32.totalorder %s15, 0
    %p98 = por %p96, %p97
    %s99 = ssub.s32 %s16, %s28
    %s100 = ssub.s32 %s17, %s24
    %s101 = sor.u32 %s99, %s100
    %p102 = scmp.eq.s32.totalorder %s101, 0
    %s104 = sadd.s32 %s103, 1
    %s105 = scalar_select %p102, %s103, %s104
    %p108 = pneg %p102
    %p109 = scmp.eq.s32.totalorder %s9, 1
    %p110 = por %p108, %p109
    %p111 = scmp.ne.s32.totalorder %s103, %s106
    %p112 = scmp.eq.s32.totalorder %s9, 0
    %p113 = por %p111, %p112
    %p114 = scmp.ne.s32.totalorder %s103, %s106
    %p115 = scmp.eq.s32.totalorder %s14, 1
    %p116 = por %p114, %p115
    %p117 = scmp.ne.s32.totalorder %s106, %s107
    %p118 = scmp.eq.s32.totalorder %s14, 0
    %p119 = por %p117, %p118
    %p120 = scmp.ne.s32.totalorder %s106, %s107
    %p121 = scmp.eq.s32.totalorder %s15, 1
    %p122 = por %p120, %p121
    %p124 = scmp.ne.s32.totalorder %s107, %s123
    %p125 = scmp.eq.s32.totalorder %s15, 0
    %p126 = por %p124, %p125
    %p127 = scmp.le.s32.totalorder 1, %s9
    %p128 = scmp.lt.s32.totalorder %s9, 3
    %p129 = pnand %p127, %p128
    %p130 = pneg %p129
    // Predicated region
    $region9: #{myconv3d_forward.1} parent=5 // pred_check
      _
    $region10: #{myconv3d_forward.1} parent=5 // pred_check_branch
      %132 = sbr.rel (%p129) target = $region12
    $region11: #{myconv3d_forward.1} parent=5 // pred_region
      %s133 = ssub.s32 %s9, 1
      // Predicated region
      $region13: #{myconv3d_forward.1} parent=11 // pred_check
        %p134 = pneg %p70
      $region14: #{myconv3d_forward.1} parent=11 // pred_check_branch
        %136 = sbr.rel (%p134) target = $region16
      $region15: #{myconv3d_forward.1} parent=11 // pred_region
        _
      $region16: #{myconv3d_forward.1} parent=11 // pred_fallthru
        _
      // Predicated region
      $region17: #{myconv3d_forward.1} parent=11 // pred_check
        %p137 = pneg %p91
      $region18: #{myconv3d_forward.1} parent=11 // pred_check_branch
        %139 = sbr.rel (%p137) target = $region20
      $region19: #{myconv3d_forward.1} parent=11 // pred_region
        _
      $region20: #{myconv3d_forward.1} parent=11 // pred_fallthru
        _
    $region12: #{myconv3d_forward.1} parent=5 // pred_fallthru
      _
    %p140 = scmp.lt.s32.totalorder %s9, 2
    // Predicated region
    $region21: #{myconv3d_forward.1} parent=5 // pred_check
      %p141 = pneg %p140
    $region22: #{myconv3d_forward.1} parent=5 // pred_check_branch
      %143 = sbr.rel (%p141) target = $region24
    $region23: #{myconv3d_forward.1} parent=5 // pred_region
      // Predicated region
      $region25: #{myconv3d_forward.1} parent=23 // pred_check
        %p144 = pneg %p43
      $region26: #{myconv3d_forward.1} parent=23 // pred_check_branch
        %146 = sbr.rel (%p144) target = $region28
      $region27: #{myconv3d_forward.1} parent=23 // pred_region
        %s147 = smul.u32 16, %s17
        %p148 = scmp.lt.s32.totalorder %s16, 1
        %s149 = scalar_select %p148, %s16, 1
        %p150 = scmp.lt.s32.totalorder %s147, 15
        %s151 = scalar_select %p150, %s147, 15
        %s152 = smul.addr %s149, 16
        %s153 = sadd.s32 %s151, %s152
        %s154 = smul.addr %s153, 8
        %s155 = scalar_lea.vmem %s0, %s154
        %s156 = smul.u32 16, %s17
      $region28: #{myconv3d_forward.1} parent=23 // pred_fallthru
        _
    $region24: #{myconv3d_forward.1} parent=5 // pred_fallthru
      _
    %p157 = scmp.le.s32.totalorder 1, %s9
    %p158 = scmp.lt.s32.totalorder %s9, 3
    %p159 = pnand %p157, %p158
    %p160 = pneg %p159
    // Predicated region
    $region29: #{myconv3d_forward.1} parent=5 // pred_check
      _
    $region30: #{myconv3d_forward.1} parent=5 // pred_check_branch
      %162 = sbr.rel (%p159) target = $region32
    $region31: #{myconv3d_forward.1} parent=5 // pred_region
      %s163 = ssub.s32 %s9, 1
      %s164 = smul.u32 16, %s19
      %p165 = scmp.lt.s32.totalorder %s18, 1
      %s166 = scalar_select %p165, %s18, 1
      %p167 = scmp.lt.s32.totalorder %s164, 15
      %s168 = scalar_select %p167, %s164, 15
      %s169 = smul.addr %s166, 16
      %s170 = sadd.s32 %s168, %s169
      %s171 = smul.addr %s170, 8
      %s172 = scalar_lea.vmem %s0, %s171
      %p173 = pneg %p49
      %p174 = pneg %p46
      %p175 = pneg %p70
      %p176 = pneg %p67
      %p177 = pneg %p91
      %p178 = pneg %p88
      %p179 = pneg %p119
      %p180 = pneg %p116
      %p181 = scmp.lt.s32.totalorder %s18, 1
      %s182 = scalar_select %p181, %s18, 1
      %p183 = scmp.lt.s32.totalorder %s19, 0
      %s184 = scalar_select %p183, %s19, 0
      %s185 = sadd.s32 %s184, %s182
      %s186 = smul.addr %s185, 8
      %s187 = scalar_lea.vmem %s3, %s186
      %s188 = smul.u32 16, %s19
      %p189 = scmp.lt.s32.totalorder %s18, 1
      %s190 = scalar_select %p189, %s18, 1
      %p191 = scmp.lt.s32.totalorder %s188, 15
      %s192 = scalar_select %p191, %s188, 15
      %s193 = smul.addr %s190, 16
      %s194 = sadd.s32 %s192, %s193
      %s195 = smul.addr %s194, 8
      %s196 = scalar_lea.vmem %s0, %s195
      %s197 = smul.u32 16, %s19
      %p198 = scmp.lt.s32.totalorder %s18, 1
      %s199 = scalar_select %p198, %s18, 1
      %p200 = scmp.lt.s32.totalorder %s19, 0
      %s201 = scalar_select %p200, %s19, 0
      %s202 = sadd.s32 %s201, %s199
      %s203 = smul.addr %s202, 8
      %s204 = scalar_lea.vmem %s3, %s203
      %v205 = vld [vmem:[%s1] sm:$0xff]
      %v206 = vld [vmem:[%s196] sm:$0xff]
      %v207 = vld [vmem:[%s196 + $0x8] sm:$0xff]
      %v208 = vld [vmem:[%s196 + $0x10] sm:$0xff]
      %v209 = vld [vmem:[%s196 + $0x18] sm:$0xff]
      %v210 = vld [vmem:[%s196 + $0x20] sm:$0xff]
      %v211 = vld [vmem:[%s196 + $0x28] sm:$0xff]
      %v212 = vld [vmem:[%s196 + $0x30] sm:$0xff]
      %v213 = vld [vmem:[%s196 + $0x38] sm:$0xff]
      %v214 = vld [vmem:[%s196 + $0x40] sm:$0xff]
      %v215 = vld [vmem:[%s196 + $0x48] sm:$0xff]
      %v216 = vld [vmem:[%s196 + $0x50] sm:$0xff]
      %v217 = vld [vmem:[%s196 + $0x58] sm:$0xff]
      %v218 = vld [vmem:[%s196 + $0x60] sm:$0xff]
      %v219 = vld [vmem:[%s196 + $0x68] sm:$0xff]
      %v220 = vld [vmem:[%s196 + $0x70] sm:$0xff]
      %v221 = vld [vmem:[%s196 + $0x78] sm:$0xff]
      %v222 = vld [vmem:[%s2] sm:$0xff]
      %224 = vset.pattern.permute.xlu0 0
      %225 = vperm.xlu0 %224, %v222
      %v226 = vpop.permute.xlu0 %225
      %228 = vmatprep.subr.mxu0 0.0
      %229 = vmatpush1.xpose.msra.mxu0 %v221
      %230 = vmatprep.subr.mxu0 0.0
      %231 = vmatpush1.xpose.msra.mxu0 %v220
      %232 = vmatprep.subr.mxu0 0.0
      %233 = vmatpush1.xpose.msra.mxu0 %v219
      %234 = vmatprep.subr.mxu0 0.0
      %235 = vmatpush1.xpose.msra.mxu0 %v218
      %236 = vmatprep.subr.mxu0 0.0
      %237 = vmatpush1.xpose.msra.mxu0 %v217
      %238 = vmatprep.subr.mxu0 0.0
      %239 = vmatpush1.xpose.msra.mxu0 %v216
      %240 = vmatprep.subr.mxu0 0.0
      %241 = vmatpush1.xpose.msra.mxu0 %v215
      %242 = vmatprep.subr.mxu0 0.0
      %243 = vmatpush1.xpose.msra.mxu0 %v214
      %244 = vmatprep.subr.mxu0 0.0
      %245 = vmatpush1.xpose.msra.mxu0 %v213
      %246 = vmatprep.subr.mxu0 0.0
      %247 = vmatpush1.xpose.msra.mxu0 %v212
      %248 = vmatprep.subr.mxu0 0.0
      %249 = vmatpush1.xpose.msra.mxu0 %v211
      %250 = vmatprep.subr.mxu0 0.0
      %251 = vmatpush1.xpose.msra.mxu0 %v210
      %252 = vmatprep.subr.mxu0 0.0
      %253 = vmatpush1.xpose.msra.mxu0 %v209
      %254 = vmatprep.subr.mxu0 0.0
      %255 = vmatpush1.xpose.msra.mxu0 %v208
      %256 = vmatprep.subr.mxu0 0.0
      %257 = vmatpush1.xpose.msra.mxu0 %v207
      %258 = vmatprep.subr.mxu0 0.0
      %259 = vmatpush1.xpose.msra.mxu0 %v206
      %260 = vmatprep.subr.mxu0 0.0
      %261 = vmatpush2.xpose.msra.mxu0 0.0
      %262 = vmatprep.subr.mxu0 0.0
      %263 = vmatpush2.xpose.msra.mxu0 0.0
      %264 = vmatprep.subr.mxu0 0.0
      %265 = vmatpush2.xpose.msra.mxu0 0.0
      %266 = vmatprep.subr.mxu0 0.0
      %267 = vmatpush2.xpose.msra.mxu0 0.0
      %268 = vmatprep.subr.mxu0 0.0
      %269 = vmatpush2.xpose.msra.mxu0 0.0
      %270 = vmatprep.subr.mxu0 0.0
      %271 = vmatpush2.xpose.msra.mxu0 0.0
      %272 = vmatprep.subr.mxu0 0.0
      %273 = vmatpush2.xpose.msra.mxu0 0.0
      %274 = vmatprep.subr.mxu0 0.0
      %275 = vmatpush2.xpose.msra.mxu0 0.0
      %276 = vmatprep.subr.mxu0 0.0
      %277 = vmatpush2.xpose.msra.mxu0 0.0
      %278 = vmatprep.subr.mxu0 0.0
      %279 = vmatpush2.xpose.msra.mxu0 0.0
      %280 = vmatprep.subr.mxu0 0.0
      %281 = vmatpush2.xpose.msra.mxu0 0.0
      %282 = vmatprep.subr.mxu0 0.0
      %283 = vmatpush2.xpose.msra.mxu0 0.0
      %284 = vmatprep.subr.mxu0 0.0
      %285 = vmatpush2.xpose.msra.mxu0 0.0
      %286 = vmatprep.subr.mxu0 0.0
      %287 = vmatpush2.xpose.msra.mxu0 0.0
      %288 = vmatprep.subr.mxu0 0.0
      %289 = vmatpush2.xpose.msra.mxu0 0.0
      %290 = vmatprep.subr.mxu0 0.0
      %291 = vmatpush2.xpose.msra.mxu0 0.0
      %292 = vmatprep.mubr.f32.mxu0 0.0
      %293 = vmatmul.mubr.f32.gmra.mxu0 %v205
      %v294 = vpop.f32.mrf.mxu0
      %v295 = vadd.f32 %v226, %v294
      %v296 = vpop.f32.mrf.mxu0
      %297 = vdwg.mxu0
      %298 = vst [vmem:[%s204] sm:$0xff] %v295
      %p299 = scmp.lt.s32.totalorder %s18, 1
      %s300 = scalar_select %p299, %s18, 1
      %p301 = scmp.lt.s32.totalorder %s19, 0
      %s302 = scalar_select %p301, %s19, 0
      %s303 = sadd.s32 %s302, %s300
      %s304 = smul.addr %s303, 8
      %s305 = scalar_lea.vmem %s3, %s304
      // Predicated region
      $region33: #{myconv3d_forward.1} parent=31 // pred_check
        %p306 = pneg %p116
      $region34: #{myconv3d_forward.1} parent=31 // pred_check_branch
        %308 = sbr.rel (%p306) target = $region36
      $region35: #{myconv3d_forward.1} parent=31 // pred_region
        _
      $region36: #{myconv3d_forward.1} parent=31 // pred_fallthru
        _
    $region32: #{myconv3d_forward.1} parent=5 // pred_fallthru
      _
    %p309 = scmp.le.s32.totalorder 2, %s9
    // Predicated region
    $region37: #{myconv3d_forward.1} parent=5 // pred_check
      %p310 = pneg %p309
    $region38: #{myconv3d_forward.1} parent=5 // pred_check_branch
      %312 = sbr.rel (%p310) target = $region40
    $region39: #{myconv3d_forward.1} parent=5 // pred_region
      %s313 = ssub.s32 %s9, 2
      // Predicated region
      $region41: #{myconv3d_forward.1} parent=39 // pred_check
        %p314 = pneg %p122
      $region42: #{myconv3d_forward.1} parent=39 // pred_check_branch
        %316 = sbr.rel (%p314) target = $region44
      $region43: #{myconv3d_forward.1} parent=39 // pred_region
        %p317 = scmp.lt.s32.totalorder %s20, 1
        %s318 = scalar_select %p317, %s20, 1
        %p319 = scmp.lt.s32.totalorder %s21, 0
        %s320 = scalar_select %p319, %s21, 0
        %s321 = sadd.s32 %s320, %s318
        %s322 = smul.addr %s321, 8
        %s323 = scalar_lea.vmem %s3, %s322
      $region44: #{myconv3d_forward.1} parent=39 // pred_fallthru
        _
    $region40: #{myconv3d_forward.1} parent=5 // pred_fallthru
      _
  $region6: #{myconv3d_forward.1} parent=0 // loop_footer
    %s13 = sadd.s32 1, %s9
  $region7: #{myconv3d_forward.1} parent=0 // loop_footer_branch
    %8 = sbr.rel target = $region3
  $region8: #{myconv3d_forward.1} parent=0 // loop_exit
    _

</llo_original>
